<compile_context>
chip_gen: v7x
topology: tpu7x:2x2x1
jax: 0.10.0
libtpu: 0.0.40
codegen_flags: <defaults>
</compile_context>

<pallas_src>
import functools

import jax
import jax.numpy as jnp
from jax.experimental import pallas as pl
from jax.experimental.pallas import tpu as pltpu


def _round_up(x, m):
    return ((x + m - 1) // m) * m


def _cdiv(a, b):
    return (a + b - 1) // b


# --------------------------------------------------------------------------- #
# Kernel
# --------------------------------------------------------------------------- #
def _feat_proj_kernel(x_ref, gamma_ref, beta_ref, w_ref, b_ref, o_ref, *,
                      eps, apply_ln):
    # x_ref:     (TM, D)   tile of flattened hidden states
    # gamma_ref: (1, D)    LayerNorm weight (replicated, single-buffered)
    # beta_ref:  (1, D)    LayerNorm bias   (replicated, single-buffered)
    # w_ref:     (D, H)    projection weight (transposed vs torch Linear), resident
    # b_ref:     (1, H)    projection bias
    # o_ref:     (TM, H)
    if apply_ln:
        x = x_ref[...].astype(jnp.float32)
        # LayerNorm over the last dim; two-pass (centered) variance for torch
        # parity, stats in f32, eps inside rsqrt.
        mean = jnp.mean(x, axis=-1, keepdims=True)
        centered = x - mean
        var = jnp.mean(centered * centered, axis=-1, keepdims=True)
        xn = (centered * jax.lax.rsqrt(var + eps)
              * gamma_ref[...].astype(jnp.float32)
              + beta_ref[...].astype(jnp.float32))
        lhs = xn.astype(w_ref.dtype)
    else:
        # No LN: skip the f32 round-trip when dtypes already match the weight.
        x = x_ref[...]
        lhs = x if x.dtype == w_ref.dtype else x.astype(w_ref.dtype)

    # MXU matmul in the weight's dtype (bf16 fast path when production weights
    # are bf16), accumulating in f32.  Bias add + downcast fused.
    y = jnp.dot(lhs, w_ref[...], preferred_element_type=jnp.float32)
    o_ref[...] = (y + b_ref[...].astype(jnp.float32)).astype(o_ref.dtype)


# --------------------------------------------------------------------------- #
# VMEM / tiling heuristics (generation-aware)
# --------------------------------------------------------------------------- #
def _vmem_usable_bytes():
    """~75% of this generation's physical VMEM (48 MiB on v7x, 96 MiB on v5e/v6e)."""
    cap = 64 << 20  # conservative fallback (v7x physical VMEM)
    try:
        cap = int(pltpu.get_tpu_info().vmem_capacity_bytes)
    except Exception:
        pass
    return int(cap * 0.75)


def _max_rows_for_vmem(D, H, xb, wb, ob, usable):
    """Largest row tile whose footprint fits the usable VMEM budget."""
    # Resident, single-buffered operands: weight + gamma/beta/bias (+ headroom
    # for compiler-internal scratch).
    resident = D * H * wb + 2 * D * xb + H * 4 + (4 << 20)
    # Per-row bytes: double-buffered x/out tiles + f32 LN temporaries + f32 acc.
    per_row = 2 * (D * xb + H * ob) + 2 * D * 4 + H * 4
    avail = usable - resident
    if avail <= per_row:
        return 8
    return max(8, int(avail // per_row))


def _vmem_budget_bytes(row_tile, D, H, xb, wb, ob, usable):
    footprint = (2 * row_tile * D * xb        # double-buffered x tile
                 + 2 * row_tile * H * ob      # double-buffered out tile
                 + D * H * wb                 # single-buffered resident weight
                 + 2 * D * xb + H * 4         # gamma / beta / bias
                 + 2 * row_tile * D * 4       # f32 LN temporaries
                 + row_tile * H * 4)          # f32 accumulator
    budget = max(int(footprint * 1.25) + (4 << 20), 16 << 20)
    return min(budget, usable)


def _resident_spec(block_shape, index_map):
    """BlockSpec for a grid-invariant operand: single buffer (no double-buffer)."""
    try:
        return pl.BlockSpec(block_shape, index_map, pipeline_mode=pl.Buffered(1))
    except TypeError:  # older JAX without pipeline_mode: fall back gracefully
        return pl.BlockSpec(block_shape, index_map)


# --------------------------------------------------------------------------- #
# Wrapper
# --------------------------------------------------------------------------- #
def hubert_feature_projection(hidden_states, ln_gamma, ln_beta, proj_w, proj_b,
                              *, eps=1e-5, max_row_tile=2048,
                              apply_layer_norm=True, out_dtype=None):
    """hidden_states: [B, S, D]; proj_w: [D, H] (torch Linear stores [H, D]).

    For the bf16 MXU fast path (critical on v5e), pass proj_w in bf16; the
    normalized activations are cast to the weight dtype before the dot.
    """
    B, S, D = hidden_states.shape
    H = proj_w.shape[1]
    rows = B * S
    out_dtype = out_dtype or hidden_states.dtype

    if ln_gamma is None:
        ln_gamma = jnp.ones((D,), dtype=hidden_states.dtype)
    if ln_beta is None:
        ln_beta = jnp.zeros((D,), dtype=hidden_states.dtype)

    xb = jnp.dtype(hidden_states.dtype).itemsize
    wb = jnp.dtype(proj_w.dtype).itemsize
    ob = jnp.dtype(out_dtype).itemsize

    # Sublane multiple for the activation dtype (8 for f32, 16 for bf16, ...).
    sublane = max(8, 32 // xb)

    usable_vmem = _vmem_usable_bytes()

    # Row-tile cap: as large as VMEM allows, bounded by max_row_tile.
    tile_cap = min(max_row_tile, _max_rows_for_vmem(D, H, xb, wb, ob, usable_vmem))
    tile_cap = max(sublane, (tile_cap // sublane) * sublane)

    # Balanced tiling: all tiles equal-sized, padding < sublane rows per tile
    # (avoids the up-to-2x waste of round_up(rows, row_tile) for rows just
    # above a tile multiple).
    n_tiles = _cdiv(rows, tile_cap)
    if n_tiles == 1 and rows >= 2 * sublane:
        # Force >=2 grid steps so the "parallel" axis can shard across both
        # v7x TensorCores; negligible cost on single-TC v5e/v6e.
        n_tiles = 2
    row_tile = _round_up(_cdiv(rows, n_tiles), sublane)
    padded_rows = n_tiles * row_tile

    x2d = hidden_states.reshape(rows, D)
    if padded_rows != rows:
        # Zero-padded rows: LN gives beta-only rows (finite), results sliced
        # off below.  Keeps DMAs and stores full-size / unmasked.
        x2d = jnp.pad(x2d, ((0, padded_rows - rows), (0, 0)))

    gamma2d = ln_gamma.reshape(1, D)
    beta2d = ln_beta.reshape(1, D)
    bias2d = proj_b.reshape(1, H)

    grid = (n_tiles,)

    out = pl.pallas_call(
        functools.partial(_feat_proj_kernel, eps=eps, apply_ln=apply_layer_norm),
        out_shape=jax.ShapeDtypeStruct((padded_rows, H), out_dtype),
        grid_spec=pltpu.PrefetchScalarGridSpec(
            num_scalar_prefetch=0,
            grid=grid,
            in_specs=[
                pl.BlockSpec((row_tile, D), lambda i: (i, 0)),     # x tile
                _resident_spec((1, D), lambda i: (0, 0)),          # gamma
                _resident_spec((1, D), lambda i: (0, 0)),          # beta
                _resident_spec((D, H), lambda i: (0, 0)),          # weight
                _resident_spec((1, H), lambda i: (0, 0)),          # bias
            ],
            out_specs=pl.BlockSpec((row_tile, H), lambda i: (i, 0)),
        ),
        compiler_params=pltpu.CompilerParams(
            dimension_semantics=("parallel",),
            vmem_limit_bytes=_vmem_budget_bytes(row_tile, D, H, xb, wb, ob,
                                                usable_vmem),
        ),
    )(x2d, gamma2d, beta2d, proj_w, bias2d)

    if padded_rows != rows:
        out = out[:rows]
    return out.reshape(B, S, H)


# --------------------------------------------------------------------------- #
# Reference + test
# --------------------------------------------------------------------------- #
def _reference(hidden_states, ln_gamma, ln_beta, proj_w, proj_b, eps=1e-5):
    x = hidden_states.astype(jnp.float32)
    mean = jnp.mean(x, axis=-1, keepdims=True)
    var = jnp.mean((x - mean) ** 2, axis=-1, keepdims=True)
    xn = (x - mean) * jax.lax.rsqrt(var + eps)
    xn = xn * ln_gamma + ln_beta
    return (xn @ proj_w + proj_b).astype(hidden_states.dtype)


if __name__ == "__main__":
    # Small synthetic config (lane-dense dims so output stores are unmasked):
    # conv_dim[-1]=128, hidden_size=256, layer_norm_eps=1e-5,
    # feat_proj_layer_norm=True, feat_proj_dropout inactive (eval mode).
    B, S, D, H = 2, 8, 128, 256
    key = jax.random.PRNGKey(0)
    k_x, k_g, k_b, k_w, k_pb = jax.random.split(key, 5)

    hidden_states = jax.random.normal(k_x, (B, S, D), dtype=jnp.float32)
    ln_gamma = 1.0 + 0.1 * jax.random.normal(k_g, (D,), dtype=jnp.float32)
    ln_beta = 0.1 * jax.random.normal(k_b, (D,), dtype=jnp.float32)
    # torch Linear weight is [H, D]; we store it transposed as [D, H].
    proj_w = (jax.random.normal(k_w, (D, H), dtype=jnp.float32)
              / jnp.sqrt(jnp.float32(D)))
    proj_b = 0.05 * jax.random.normal(k_pb, (H,), dtype=jnp.float32)

    out = hubert_feature_projection(hidden_states, ln_gamma, ln_beta,
                                    proj_w, proj_b)
    out = jax.block_until_ready(out)

    ref = _reference(hidden_states, ln_gamma, ln_beta, proj_w, proj_b)
    assert out.shape == (B, S, H)
    assert jnp.allclose(out, ref, atol=1e-3, rtol=1e-3), "mismatch vs reference"

    # Also exercise the no-LayerNorm config (feat_proj_layer_norm=False).
    out_noln = hubert_feature_projection(hidden_states, None, None,
                                         proj_w, proj_b,
                                         apply_layer_norm=False)
    out_noln = jax.block_until_ready(out_noln)
    ref_noln = (hidden_states.reshape(-1, D) @ proj_w + proj_b).reshape(B, S, H)
    assert jnp.allclose(out_noln, ref_noln, atol=1e-3, rtol=1e-3), \
        "mismatch vs reference (no LN)"

    print("KERNEL_OK")
</pallas_src>

<mosaic_0001>
module attributes {stable_mosaic.version = 11 : i64} {
  func.func @_feat_proj_kernel(%arg0: i32, %arg1: memref<8x128xf32, #tpu.memory_space<vmem>>, %arg2: memref<1x128xf32, #tpu.memory_space<vmem>>, %arg3: memref<1x128xf32, #tpu.memory_space<vmem>>, %arg4: memref<128x256xf32, #tpu.memory_space<vmem>>, %arg5: memref<1x256xf32, #tpu.memory_space<vmem>>, %arg6: memref<8x256xf32, #tpu.memory_space<vmem>>) attributes {dimension_semantics = [#tpu.dimension_semantics<parallel>], iteration_bounds = array<i64: 2>, scalar_prefetch = 0 : i64, scratch_operands = 0 : i64, tpu.core_type = #tpu.core_type<tc>, window_params = [{transform_indices = @transform_0, window_bounds = array<i64: 8, 128>}, {pipeline_mode = #tpu.pipeline_mode<synchronous>, transform_indices = @transform_1, window_bounds = array<i64: 1, 128>}, {pipeline_mode = #tpu.pipeline_mode<synchronous>, transform_indices = @transform_2, window_bounds = array<i64: 1, 128>}, {pipeline_mode = #tpu.pipeline_mode<synchronous>, transform_indices = @transform_3, window_bounds = array<i64: 128, 256>}, {pipeline_mode = #tpu.pipeline_mode<synchronous>, transform_indices = @transform_4, window_bounds = array<i64: 1, 256>}, {transform_indices = @transform_5, window_bounds = array<i64: 8, 256>}]} {
    %c0 = arith.constant 0 : index
    %c0_0 = arith.constant 0 : index
    %0 = vector.load %arg1[%c0, %c0_0] : memref<8x128xf32, #tpu.memory_space<vmem>>, vector<8x128xf32>
    %cst = arith.constant dense<0.000000e+00> : vector<8xf32>
    %1 = vector.multi_reduction <add>, %0, %cst [1] : vector<8x128xf32> to vector<8xf32>
    %2 = vector.shape_cast %1 : vector<8xf32> to vector<8x1xf32>
    %cst_1 = arith.constant 1.280000e+02 : f32
    %3 = vector.broadcast %cst_1 : f32 to vector<8x1xf32>
    %4 = arith.divf %2, %3 : vector<8x1xf32>
    %5 = vector.broadcast %4 : vector<8x1xf32> to vector<8x128xf32>
    %6 = arith.subf %0, %5 : vector<8x128xf32>
    %7 = arith.mulf %6, %6 : vector<8x128xf32>
    %cst_2 = arith.constant dense<0.000000e+00> : vector<8xf32>
    %8 = vector.multi_reduction <add>, %7, %cst_2 [1] : vector<8x128xf32> to vector<8xf32>
    %9 = vector.shape_cast %8 : vector<8xf32> to vector<8x1xf32>
    %cst_3 = arith.constant 1.280000e+02 : f32
    %10 = vector.broadcast %cst_3 : f32 to vector<8x1xf32>
    %11 = arith.divf %9, %10 : vector<8x1xf32>
    %cst_4 = arith.constant 9.99999974E-6 : f32
    %12 = vector.broadcast %cst_4 : f32 to vector<8x1xf32>
    %13 = arith.addf %11, %12 : vector<8x1xf32>
    %14 = math.rsqrt %13 : vector<8x1xf32>
    %15 = vector.broadcast %14 : vector<8x1xf32> to vector<8x128xf32>
    %16 = arith.mulf %6, %15 : vector<8x128xf32>
    %c0_5 = arith.constant 0 : index
    %c0_6 = arith.constant 0 : index
    %17 = vector.load %arg2[%c0_5, %c0_6] : memref<1x128xf32, #tpu.memory_space<vmem>>, vector<1x128xf32>
    %18 = vector.broadcast %17 : vector<1x128xf32> to vector<8x128xf32>
    %19 = arith.mulf %16, %18 : vector<8x128xf32>
    %c0_7 = arith.constant 0 : index
    %c0_8 = arith.constant 0 : index
    %20 = vector.load %arg3[%c0_7, %c0_8] : memref<1x128xf32, #tpu.memory_space<vmem>>, vector<1x128xf32>
    %21 = vector.broadcast %20 : vector<1x128xf32> to vector<8x128xf32>
    %22 = arith.addf %19, %21 : vector<8x128xf32>
    %c0_9 = arith.constant 0 : index
    %c0_10 = arith.constant 0 : index
    %23 = vector.load %arg4[%c0_9, %c0_10] : memref<128x256xf32, #tpu.memory_space<vmem>>, vector<128x256xf32>
    %cst_11 = arith.constant dense<0.000000e+00> : vector<8x256xf32>
    %24 = tpu.matmul %22, %23, %cst_11 {dimension_numbers = #tpu.dot_dimension_numbers<[1], [0], [0], [1], [0, 0, 1, 1], [], []>} : vector<8x128xf32>, vector<128x256xf32>, vector<8x256xf32> -> vector<8x256xf32>
    %c0_12 = arith.constant 0 : index
    %c0_13 = arith.constant 0 : index
    %25 = vector.load %arg5[%c0_12, %c0_13] : memref<1x256xf32, #tpu.memory_space<vmem>>, vector<1x256xf32>
    %26 = vector.broadcast %25 : vector<1x256xf32> to vector<8x256xf32>
    %27 = arith.addf %24, %26 : vector<8x256xf32>
    %c0_14 = arith.constant 0 : index
    %c0_15 = arith.constant 0 : index
    %28 = vector.load %arg6[%c0_14, %c0_15] : memref<8x256xf32, #tpu.memory_space<vmem>>, vector<8x256xf32>
    tpu.vector_store %arg6[%c0_14, %c0_15], %27 {strides = array<i32>} : memref<8x256xf32, #tpu.memory_space<vmem>>, vector<8x256xf32>,
    return
  }
  func.func @transform_0(%arg0: i32) -> (i32, i32) {
    %c0_i32 = arith.constant 0 : i32
    %c0_i32_0 = arith.constant 0 : i32
    return %arg0, %c0_i32 : i32, i32
  }
  func.func @transform_1(%arg0: i32) -> (i32, i32) {
    %c0_i32 = arith.constant 0 : i32
    %c0_i32_0 = arith.constant 0 : i32
    %c0_i32_1 = arith.constant 0 : i32
    return %c0_i32, %c0_i32_0 : i32, i32
  }
  func.func @transform_2(%arg0: i32) -> (i32, i32) {
    %c0_i32 = arith.constant 0 : i32
    %c0_i32_0 = arith.constant 0 : i32
    %c0_i32_1 = arith.constant 0 : i32
    return %c0_i32, %c0_i32_0 : i32, i32
  }
  func.func @transform_3(%arg0: i32) -> (i32, i32) {
    %c0_i32 = arith.constant 0 : i32
    %c0_i32_0 = arith.constant 0 : i32
    %c0_i32_1 = arith.constant 0 : i32
    return %c0_i32, %c0_i32_0 : i32, i32
  }
  func.func @transform_4(%arg0: i32) -> (i32, i32) {
    %c0_i32 = arith.constant 0 : i32
    %c0_i32_0 = arith.constant 0 : i32
    %c0_i32_1 = arith.constant 0 : i32
    return %c0_i32, %c0_i32_0 : i32, i32
  }
  func.func @transform_5(%arg0: i32) -> (i32, i32) {
    %c0_i32 = arith.constant 0 : i32
    %c0_i32_0 = arith.constant 0 : i32
    return %arg0, %c0_i32 : i32, i32
  }
}

</mosaic_0001>

<llo_original>
// kernel: tpu_custom_call.1
$region0: #{tpu_custom_call.1}
  #allocation0 [shape = 'u32[]', space=smem, size = 0x4, offset = 0x4, fixed_abs, tag = 'smem constant byte address 0x4 - core index']
  #allocation1 [shape = 'u32[144,128]{1,0:T(1,128)}', space=vmem, size = 0x12000, scoped, tag = 'internal scratch']
  %s0 = inlined_call_operand.hbm [shape: f32[16,128], index: 0, kind: input, shape index: {}]
  %s1 = inlined_call_operand.vmem [shape: f32[1,128], index: 1, kind: input, shape index: {}]
  %s2 = inlined_call_operand.vmem [shape: f32[1,128], index: 2, kind: input, shape index: {}]
  %s3 = inlined_call_operand.hbm [shape: f32[128,256], index: 3, kind: input, shape index: {}]
  %s4 = inlined_call_operand.vmem [shape: f32[1,256], index: 4, kind: input, shape index: {}]
  %s5 = inlined_call_operand.hbm [shape: f32[16,256], index: 5, kind: output, shape index: {}]
  %s6 = sld [smem:[#allocation0]]
  $region61: #{tpu_custom_call.1} parent=0
    _
  %s8 = ssub.s32 1, %s6
  %s9 = scalar_select 0, %s8, %s6
  $region1: #{tpu_custom_call.1} parent=0
    #allocation2 [shape = 'u8[8192]{0}', space=vmem, size = 0x2000, scoped, tag = 'input window, operand 0']
    #allocation3 [shape = 's32[2]{0}', space=sflag, size = 0x8, scoped, tag = 'scoped memory for tpu_custom_call.1']
    #allocation4 [shape = 's32[2]{0}', space=sflag, size = 0x8, scoped, tag = 'scoped memory for tpu_custom_call.1']
    #allocation5 [shape = 'u8[131072]{0}', space=vmem, size = 0x20000, scoped, tag = 'input window, operand 3, single buffered']
    #allocation6 [shape = 's32[1]{0}', space=sflag, size = 0x4, scoped, tag = 'scoped memory for tpu_custom_call.1']
    #allocation7 [shape = 'u8[16384]{0}', space=vmem, size = 0x4000, scoped, tag = 'output window, operand 0']
    %10 = vsyncpa [#allocation3], 0
    %s11 = scalar_lea.sflag [#allocation3], 1
    %12 = vsyncpa %s11, 0
    %13 = vsyncpa [#allocation6], 0
    %14 = vsyncpa [#allocation4], 0
    %s15 = scalar_lea.sflag [#allocation4], 1
    %16 = vsyncpa %s15, 0
    loop: start=0, step=1, limit=4
    $region2: #{tpu_custom_call.1} parent=1 // loop_pre_header
      _
    $region3: #{tpu_custom_call.1} parent=1 // loop_header
      %s18 = sphi 0, %s22
      %p19 = scmp.ge.s32.totalorder %s18, 4
      %s28 = sphi 0, %s30
      %s31 = sphi 0, %s28
      %s32 = sphi 0, %s31
      %s48 = sphi 0, %s32
      %s52 = sphi 0, %s52
      %s54 = sphi 0, %s52
      %s55 = sphi 0, %s54
      %s69 = sphi 0, %s55
      %s73 = sphi 0, %s73
      %s75 = sphi 0, %s73
      %s76 = sphi 0, %s75
      %s90 = sphi 0, %s76
      %s94 = sphi 0, %s94
      %s96 = sphi 0, %s94
      %s97 = sphi 0, %s96
      %s111 = sphi 0, %s97
      %s115 = sphi 0, %s115
      %s117 = sphi 0, %s115
      %s118 = sphi 0, %s117
      %s132 = sphi 0, %s118
      %s138 = sphi 0, %s140
      %s141 = sphi 0, %s138
      %s142 = sphi 0, %s141
      %s158 = sphi 0, %s142
    $region4: #{tpu_custom_call.1} parent=1 // loop_header_branch
      %21 = sbr.rel (%p19) target = $region8
    $region5: #{tpu_custom_call.1} parent=1 // loop_body
      %s23 = ssub.s32 %s18, 1
      %s24 = ssub.s32 %s18, 2
      %s25 = sadd.s32 %s18, 1
      %s26 = ssub.s32 %s18, %s25
      %p27 = scmp.eq.s32.totalorder %s26, 0
      %s29 = sadd.s32 %s28, 1
      %s30 = scalar_select %p27, %s28, %s29
      %p33 = pneg %p27
      %p34 = scmp.eq.s32.totalorder %s18, 1
      %p35 = por %p33, %p34
      %p36 = scmp.ne.s32.totalorder %s28, %s31
      %p37 = scmp.eq.s32.totalorder %s18, 0
      %p38 = por %p36, %p37
      %p39 = scmp.ne.s32.totalorder %s28, %s31
      %p40 = scmp.eq.s32.totalorder %s23, 1
      %p41 = por %p39, %p40
      %p42 = scmp.ne.s32.totalorder %s31, %s32
      %p43 = scmp.eq.s32.totalorder %s23, 0
      %p44 = por %p42, %p43
      %p45 = scmp.ne.s32.totalorder %s31, %s32
      %p46 = scmp.eq.s32.totalorder %s24, 1
      %p47 = por %p45, %p46
      %p49 = scmp.ne.s32.totalorder %s32, %s48
      %p50 = scmp.eq.s32.totalorder %s24, 0
      %p51 = por %p49, %p50
      %s53 = sadd.s32 %s52, 1
      %p56 = scmp.eq.s32.totalorder %s18, 1
      %p57 = scmp.ne.s32.totalorder %s52, %s54
      %p58 = scmp.eq.s32.totalorder %s18, 0
      %p59 = por %p57, %p58
      %p60 = scmp.ne.s32.totalorder %s52, %s54
      %p61 = scmp.eq.s32.totalorder %s23, 1
      %p62 = por %p60, %p61
      %p63 = scmp.ne.s32.totalorder %s54, %s55
      %p64 = scmp.eq.s32.totalorder %s23, 0
      %p65 = por %p63, %p64
      %p66 = scmp.ne.s32.totalorder %s54, %s55
      %p67 = scmp.eq.s32.totalorder %s24, 1
      %p68 = por %p66, %p67
      %p70 = scmp.ne.s32.totalorder %s55, %s69
      %p71 = scmp.eq.s32.totalorder %s24, 0
      %p72 = por %p70, %p71
      %s74 = sadd.s32 %s73, 1
      %p77 = scmp.eq.s32.totalorder %s18, 1
      %p78 = scmp.ne.s32.totalorder %s73, %s75
      %p79 = scmp.eq.s32.totalorder %s18, 0
      %p80 = por %p78, %p79
      %p81 = scmp.ne.s32.totalorder %s73, %s75
      %p82 = scmp.eq.s32.totalorder %s23, 1
      %p83 = por %p81, %p82
      %p84 = scmp.ne.s32.totalorder %s75, %s76
      %p85 = scmp.eq.s32.totalorder %s23, 0
      %p86 = por %p84, %p85
      %p87 = scmp.ne.s32.totalorder %s75, %s76
      %p88 = scmp.eq.s32.totalorder %s24, 1
      %p89 = por %p87, %p88
      %p91 = scmp.ne.s32.totalorder %s76, %s90
      %p92 = scmp.eq.s32.totalorder %s24, 0
      %p93 = por %p91, %p92
      %s95 = sadd.s32 %s94, 1
      %p98 = scmp.eq.s32.totalorder %s18, 1
      %p99 = scmp.ne.s32.totalorder %s94, %s96
      %p100 = scmp.eq.s32.totalorder %s18, 0
      %p101 = por %p99, %p100
      %p102 = scmp.ne.s32.totalorder %s94, %s96
      %p103 = scmp.eq.s32.totalorder %s23, 1
      %p104 = por %p102, %p103
      %p105 = scmp.ne.s32.totalorder %s96, %s97
      %p106 = scmp.eq.s32.totalorder %s23, 0
      %p107 = por %p105, %p106
      %p108 = scmp.ne.s32.totalorder %s96, %s97
      %p109 = scmp.eq.s32.totalorder %s24, 1
      %p110 = por %p108, %p109
      %p112 = scmp.ne.s32.totalorder %s97, %s111
      %p113 = scmp.eq.s32.totalorder %s24, 0
      %p114 = por %p112, %p113
      %s116 = sadd.s32 %s115, 1
      %p119 = scmp.eq.s32.totalorder %s18, 1
      %p120 = scmp.ne.s32.totalorder %s115, %s117
      %p121 = scmp.eq.s32.totalorder %s18, 0
      %p122 = por %p120, %p121
      %p123 = scmp.ne.s32.totalorder %s115, %s117
      %p124 = scmp.eq.s32.totalorder %s23, 1
      %p125 = por %p123, %p124
      %p126 = scmp.ne.s32.totalorder %s117, %s118
      %p127 = scmp.eq.s32.totalorder %s23, 0
      %p128 = por %p126, %p127
      %p129 = scmp.ne.s32.totalorder %s117, %s118
      %p130 = scmp.eq.s32.totalorder %s24, 1
      %p131 = por %p129, %p130
      %p133 = scmp.ne.s32.totalorder %s118, %s132
      %p134 = scmp.eq.s32.totalorder %s24, 0
      %p135 = por %p133, %p134
      %s136 = ssub.s32 %s18, %s25
      %p137 = scmp.eq.s32.totalorder %s136, 0
      %s139 = sadd.s32 %s138, 1
      %s140 = scalar_select %p137, %s138, %s139
      %p143 = pneg %p137
      %p144 = scmp.eq.s32.totalorder %s18, 1
      %p145 = por %p143, %p144
      %p146 = scmp.ne.s32.totalorder %s138, %s141
      %p147 = scmp.eq.s32.totalorder %s18, 0
      %p148 = por %p146, %p147
      %p149 = scmp.ne.s32.totalorder %s138, %s141
      %p150 = scmp.eq.s32.totalorder %s23, 1
      %p151 = por %p149, %p150
      %p152 = scmp.ne.s32.totalorder %s141, %s142
      %p153 = scmp.eq.s32.totalorder %s23, 0
      %p154 = por %p152, %p153
      %p155 = scmp.ne.s32.totalorder %s141, %s142
      %p156 = scmp.eq.s32.totalorder %s24, 1
      %p157 = por %p155, %p156
      %p159 = scmp.ne.s32.totalorder %s142, %s158
      %p160 = scmp.eq.s32.totalorder %s24, 0
      %p161 = por %p159, %p160
      %p162 = scmp.le.s32.totalorder 1, %s18
      %p163 = scmp.lt.s32.totalorder %s18, 3
      %p164 = pnand %p162, %p163
      %p165 = pneg %p164
      // Predicated region
      $region9: #{tpu_custom_call.1} parent=5 // pred_check
        _
      $region10: #{tpu_custom_call.1} parent=5 // pred_check_branch
        %167 = sbr.rel (%p164) target = $region12
      $region11: #{tpu_custom_call.1} parent=5 // pred_region
        %s168 = ssub.s32 %s18, 1
        // Predicated region
        $region13: #{tpu_custom_call.1} parent=11 // pred_check
          %p169 = pneg %p65
        $region14: #{tpu_custom_call.1} parent=11 // pred_check_branch
          %171 = sbr.rel (%p169) target = $region16
        $region15: #{tpu_custom_call.1} parent=11 // pred_region
          _
        $region16: #{tpu_custom_call.1} parent=11 // pred_fallthru
          _
        // Predicated region
        $region17: #{tpu_custom_call.1} parent=11 // pred_check
          %p172 = pneg %p86
        $region18: #{tpu_custom_call.1} parent=11 // pred_check_branch
          %174 = sbr.rel (%p172) target = $region20
        $region19: #{tpu_custom_call.1} parent=11 // pred_region
          _
        $region20: #{tpu_custom_call.1} parent=11 // pred_fallthru
          _
        // Predicated region
        $region21: #{tpu_custom_call.1} parent=11 // pred_check
          %p175 = pneg %p107
        $region22: #{tpu_custom_call.1} parent=11 // pred_check_branch
          %177 = sbr.rel (%p175) target = $region24
        $region23: #{tpu_custom_call.1} parent=11 // pred_region
          %s179 = ssub.s32 4096, 4096
          %180 = vsyncadd [#allocation6], %s179
          %s181 = sshll.u32 [#allocation5], 4
          %s182 = int_to_ptr.vmem [resolvable:$true] %s181
          %187 = dma.hbm_to_vmem [thread:$0]  %s3, 4096, %s182, [#allocation6], 256, 256, 16
        $region24: #{tpu_custom_call.1} parent=11 // pred_fallthru
          _
        // Predicated region
        $region25: #{tpu_custom_call.1} parent=11 // pred_check
          %p188 = pneg %p128
        $region26: #{tpu_custom_call.1} parent=11 // pred_check_branch
          %190 = sbr.rel (%p188) target = $region28
        $region27: #{tpu_custom_call.1} parent=11 // pred_region
          _
        $region28: #{tpu_custom_call.1} parent=11 // pred_fallthru
          _
      $region12: #{tpu_custom_call.1} parent=5 // pred_fallthru
        _
      %p191 = scmp.lt.s32.totalorder %s18, 2
      // Predicated region
      $region29: #{tpu_custom_call.1} parent=5 // pred_check
        %p192 = pneg %p191
      $region30: #{tpu_custom_call.1} parent=5 // pred_check_branch
        %194 = sbr.rel (%p192) target = $region32
      $region31: #{tpu_custom_call.1} parent=5 // pred_region
        // Predicated region
        $region33: #{tpu_custom_call.1} parent=31 // pred_check
          %p195 = pneg %p38
        $region34: #{tpu_custom_call.1} parent=31 // pred_check_branch
          %197 = sbr.rel (%p195) target = $region36
        $region35: #{tpu_custom_call.1} parent=31 // pred_region
          %s198 = sand.u32 %s28, 1
          %s199 = scalar_lea.sflag [#allocation3], %s198
          %s200 = sand.u32 %s28, 1
          %s201 = smul.addr %s200, 8
          %s202 = scalar_lea.vmem [#allocation2], %s201
          %s204 = ssub.s32 128, 128
          %205 = vsyncadd %s199, %s204
          %s206 = smul.addr %s18, 128
          %s207 = scalar_lea.hbm %s0, %s206
          %s209 = sshll.u32 %s202, 4
          %s210 = int_to_ptr.vmem [resolvable:$true] %s209
          %212 = dma.hbm_to_vmem [thread:$0]  %s207, 128, %s210, %s199
        $region36: #{tpu_custom_call.1} parent=31 // pred_fallthru
          _
      $region32: #{tpu_custom_call.1} parent=5 // pred_fallthru
        _
      %p213 = scmp.le.s32.totalorder 1, %s18
      %p214 = scmp.lt.s32.totalorder %s18, 3
      %p215 = pnand %p213, %p214
      %p216 = pneg %p215
      // Predicated region
      $region37: #{tpu_custom_call.1} parent=5 // pred_check
        _
      $region38: #{tpu_custom_call.1} parent=5 // pred_check_branch
        %218 = sbr.rel (%p215) target = $region40
      $region39: #{tpu_custom_call.1} parent=5 // pred_region
        %s219 = ssub.s32 %s18, 1
        %s220 = sand.u32 %s31, 1
        %s221 = scalar_lea.sflag [#allocation3], %s220
        %s222 = sand.u32 %s31, 1
        %s223 = smul.addr %s222, 8
        %s224 = scalar_lea.vmem [#allocation2], %s223
        // Predicated region
        $region41: #{tpu_custom_call.1} parent=39 // pred_check
          %p225 = pneg %p44
        $region42: #{tpu_custom_call.1} parent=39 // pred_check_branch
          %227 = sbr.rel (%p225) target = $region44
        $region43: #{tpu_custom_call.1} parent=39 // pred_region
          %228 = dma.done %s221, 128
        $region44: #{tpu_custom_call.1} parent=39 // pred_fallthru
          _
        // Predicated region
        $region45: #{tpu_custom_call.1} parent=39 // pred_check
          %p229 = pneg %p107
        $region46: #{tpu_custom_call.1} parent=39 // pred_check_branch
          %231 = sbr.rel (%p229) target = $region48
        $region47: #{tpu_custom_call.1} parent=39 // pred_region
          %232 = dma.done [#allocation6], 4096
        $region48: #{tpu_custom_call.1} parent=39 // pred_fallthru
          _
        %s233 = sand.u32 %s31, 1
        %s234 = scalar_lea.sflag [#allocation3], %s233
        %s235 = sand.u32 %s31, 1
        %s236 = smul.addr %s235, 8
        %s237 = scalar_lea.vmem [#allocation2], %s236
        %p238 = pneg %p44
        %p239 = pneg %p41
        %p240 = pneg %p65
        %p241 = pneg %p62
        %p242 = pneg %p86
        %p243 = pneg %p83
        %p244 = pneg %p107
        %p245 = pneg %p104
        %p246 = pneg %p128
        %p247 = pneg %p125
        %p248 = pneg %p154
        %p249 = pneg %p151
        %s250 = sand.u32 %s141, 1
        %s251 = scalar_lea.sflag [#allocation4], %s250
        %s252 = sand.u32 %s141, 1
        %s253 = smul.addr %s252, 16
        %s254 = scalar_lea.vmem [#allocation7], %s253
        %v255 = vld [vmem:[%s224] sm:$0xff]
        %256 = vadd.xlane.f32.xlu0 %v255
        %v257 = vpop.xlane.xlu0 %256
        %v258 = vrcp.pop 128.0
        %v259 = vmul.f32 %v257, %v258
        %v260 = vsub.f32 %v255, %v259
        %v261 = vmul.f32 %v260, %v260
        %262 = vadd.xlane.f32.xlu0 %v261
        %v263 = vpop.xlane.xlu0 %262
        %v264 = vmul.f32 %v263, %v258
        %v265 = vadd.f32 %v264, 1e-05
        %v266 = vrsqrt.pop %v265
        %v267 = vmul.f32 %v260, %v266
        %v268 = vld [vmem:[%s1] sm:$0x1]
        %v270 = vlaneseq
        %v271 = vshrl.u32 %v270, 7
        %v272 = vsub.s32 0, %v271
        %v273 = vrot.slane %v268, %v272
        %v275 = vmul.f32 %v267, %v273
        %v276 = vld [vmem:[%s2] sm:$0x1]
        %v278 = vlaneseq
        %v279 = vshrl.u32 %v278, 7
        %v280 = vsub.s32 0, %v279
        %v281 = vrot.slane %v276, %v280
        %v283 = vadd.f32 %v275, %v281
        %v284 = vld [vmem:[#allocation5] sm:$0xff]
        %v285 = vld [vmem:[#allocation5 + $0x8] sm:$0xff]
        %v286 = vld [vmem:[#allocation5 + $0x10] sm:$0xff]
        %v287 = vld [vmem:[#allocation5 + $0x18] sm:$0xff]
        %v288 = vld [vmem:[#allocation5 + $0x20] sm:$0xff]
        %v289 = vld [vmem:[#allocation5 + $0x28] sm:$0xff]
        %v290 = vld [vmem:[#allocation5 + $0x30] sm:$0xff]
        %v291 = vld [vmem:[#allocation5 + $0x38] sm:$0xff]
        %v292 = vld [vmem:[#allocation5 + $0x40] sm:$0xff]
        %v293 = vld [vmem:[#allocation5 + $0x48] sm:$0xff]
        %v294 = vld [vmem:[#allocation5 + $0x50] sm:$0xff]
        %v295 = vld [vmem:[#allocation5 + $0x58] sm:$0xff]
        %v296 = vld [vmem:[#allocation5 + $0x60] sm:$0xff]
        %v297 = vld [vmem:[#allocation5 + $0x68] sm:$0xff]
        %v298 = vld [vmem:[#allocation5 + $0x70] sm:$0xff]
        %v299 = vld [vmem:[#allocation5 + $0x78] sm:$0xff]
        %v300 = vld [vmem:[#allocation5 + $0x80] sm:$0xff]
        %v301 = vld [vmem:[#allocation5 + $0x88] sm:$0xff]
        %v302 = vld [vmem:[#allocation5 + $0x90] sm:$0xff]
        %v303 = vld [vmem:[#allocation5 + $0x98] sm:$0xff]
        %v304 = vld [vmem:[#allocation5 + $0xa0] sm:$0xff]
        %v305 = vld [vmem:[#allocation5 + $0xa8] sm:$0xff]
        %v306 = vld [vmem:[#allocation5 + $0xb0] sm:$0xff]
        %v307 = vld [vmem:[#allocation5 + $0xb8] sm:$0xff]
        %v308 = vld [vmem:[#allocation5 + $0xc0] sm:$0xff]
        %v309 = vld [vmem:[#allocation5 + $0xc8] sm:$0xff]
        %v310 = vld [vmem:[#allocation5 + $0xd0] sm:$0xff]
        %v311 = vld [vmem:[#allocation5 + $0xd8] sm:$0xff]
        %v312 = vld [vmem:[#allocation5 + $0xe0] sm:$0xff]
        %v313 = vld [vmem:[#allocation5 + $0xe8] sm:$0xff]
        %v314 = vld [vmem:[#allocation5 + $0xf0] sm:$0xff]
        %v315 = vld [vmem:[#allocation5 + $0xf8] sm:$0xff]
        %v316 = vld [vmem:[%s4] sm:$0x3]
        %v318 = vlaneseq
        %v319 = vshrl.u32 %v318, 7
        %v320 = vsub.s32 0, %v319
        %v321 = vrot.slane %v316, %v320
        %v322 = vlaneseq
        %v323 = vshrl.u32 %v322, 7
        %v324 = vsub.s32 1, %v323
        %v325 = vrot.slane %v316, %v324
        %328 = vmatprep.subr.mxu0 %v285
        %329 = vmatpush1.msra.mxu0 %v284
        %330 = vmatprep.subr.mxu0 %v287
        %331 = vmatpush1.msra.mxu0 %v286
        %332 = vmatprep.subr.mxu0 %v289
        %333 = vmatpush1.msra.mxu0 %v288
        %334 = vmatprep.subr.mxu0 %v291
        %335 = vmatpush1.msra.mxu0 %v290
        %336 = vmatprep.subr.mxu0 %v293
        %337 = vmatpush1.msra.mxu0 %v292
        %338 = vmatprep.subr.mxu0 %v295
        %339 = vmatpush1.msra.mxu0 %v294
        %340 = vmatprep.subr.mxu0 %v297
        %341 = vmatpush1.msra.mxu0 %v296
        %342 = vmatprep.subr.mxu0 %v299
        %343 = vmatpush1.msra.mxu0 %v298
        %344 = vmatprep.subr.mxu0 %v301
        %345 = vmatpush1.msra.mxu0 %v300
        %346 = vmatprep.subr.mxu0 %v303
        %347 = vmatpush1.msra.mxu0 %v302
        %348 = vmatprep.subr.mxu0 %v305
        %349 = vmatpush1.msra.mxu0 %v304
        %350 = vmatprep.subr.mxu0 %v307
        %351 = vmatpush1.msra.mxu0 %v306
        %352 = vmatprep.subr.mxu0 %v309
        %353 = vmatpush1.msra.mxu0 %v308
        %354 = vmatprep.subr.mxu0 %v311
        %355 = vmatpush1.msra.mxu0 %v310
        %356 = vmatprep.subr.mxu0 %v313
        %357 = vmatpush1.msra.mxu0 %v312
        %358 = vmatprep.subr.mxu0 %v315
        %359 = vmatpush1.msra.mxu0 %v314
        %360 = vmatprep.subr.mxu0 0.0
        %361 = vmatpush1.msra.mxu0 0.0
        %362 = vmatprep.subr.mxu0 0.0
        %363 = vmatpush1.msra.mxu0 0.0
        %364 = vmatprep.subr.mxu0 0.0
        %365 = vmatpush1.msra.mxu0 0.0
        %366 = vmatprep.subr.mxu0 0.0
        %367 = vmatpush1.msra.mxu0 0.0
        %368 = vmatprep.subr.mxu0 0.0
        %369 = vmatpush1.msra.mxu0 0.0
        %370 = vmatprep.subr.mxu0 0.0
        %371 = vmatpush1.msra.mxu0 0.0
        %372 = vmatprep.subr.mxu0 0.0
        %373 = vmatpush1.msra.mxu0 0.0
        %374 = vmatprep.subr.mxu0 0.0
        %375 = vmatpush1.msra.mxu0 0.0
        %376 = vmatprep.subr.mxu0 0.0
        %377 = vmatpush1.msra.mxu0 0.0
        %378 = vmatprep.subr.mxu0 0.0
        %379 = vmatpush1.msra.mxu0 0.0
        %380 = vmatprep.subr.mxu0 0.0
        %381 = vmatpush1.msra.mxu0 0.0
        %382 = vmatprep.subr.mxu0 0.0
        %383 = vmatpush1.msra.mxu0 0.0
        %384 = vmatprep.subr.mxu0 0.0
        %385 = vmatpush1.msra.mxu0 0.0
        %386 = vmatprep.subr.mxu0 0.0
        %387 = vmatpush1.msra.mxu0 0.0
        %388 = vmatprep.subr.mxu0 0.0
        %389 = vmatpush1.msra.mxu0 0.0
        %390 = vmatprep.subr.mxu0 0.0
        %391 = vmatpush1.msra.mxu0 0.0
        %392 = vmatprep.mubr.f32.mxu0 0.0
        %393 = vmatmul.mubr.f32.gmra.mrb[0].mxu0 %v283
        %v394 = vpop.f32.mrb[0].mxu0
        %v395 = vadd.f32 %v321, %v394
        %v396 = vpop.f32.mrb[0].mxu0
        %v397 = vadd.f32 %v325, %v396
        %398 = vdwg.mxu0
        %399 = vst [vmem:[%s254] sm:$0xff] %v395
        %400 = vst [vmem:[%s254 + $0x8] sm:$0xff] %v397
        %s401 = sand.u32 %s141, 1
        %s402 = scalar_lea.sflag [#allocation4], %s401
        %s403 = sand.u32 %s141, 1
        %s404 = smul.addr %s403, 16
        %s405 = scalar_lea.vmem [#allocation7], %s404
        // Predicated region
        $region49: #{tpu_custom_call.1} parent=39 // pred_check
          %p406 = pneg %p151
        $region50: #{tpu_custom_call.1} parent=39 // pred_check_branch
          %408 = sbr.rel (%p406) target = $region52
        $region51: #{tpu_custom_call.1} parent=39 // pred_region
          %s410 = ssub.s32 256, 256
          %411 = vsyncadd %s402, %s410
          %s412 = smul.addr %s23, 2
          %s413 = smul.addr %s412, 128
          %s414 = scalar_lea.hbm %s5, %s413
          %s416 = sshll.u32 %s405, 4
          %s417 = int_to_ptr.vmem [resolvable:$true] %s416
          %419 = dma.vmem_to_hbm [thread:$0]  %s417, 256, %s414, %s402
        $region52: #{tpu_custom_call.1} parent=39 // pred_fallthru
          _
      $region40: #{tpu_custom_call.1} parent=5 // pred_fallthru
        _
      %p420 = scmp.le.s32.totalorder 2, %s18
      // Predicated region
      $region53: #{tpu_custom_call.1} parent=5 // pred_check
        %p421 = pneg %p420
      $region54: #{tpu_custom_call.1} parent=5 // pred_check_branch
        %423 = sbr.rel (%p421) target = $region56
      $region55: #{tpu_custom_call.1} parent=5 // pred_region
        %s424 = ssub.s32 %s18, 2
        // Predicated region
        $region57: #{tpu_custom_call.1} parent=55 // pred_check
          %p425 = pneg %p157
        $region58: #{tpu_custom_call.1} parent=55 // pred_check_branch
          %427 = sbr.rel (%p425) target = $region60
        $region59: #{tpu_custom_call.1} parent=55 // pred_region
          %s428 = sand.u32 %s142, 1
          %s429 = scalar_lea.sflag [#allocation4], %s428
          %s430 = sand.u32 %s142, 1
          %s431 = smul.addr %s430, 16
          %s432 = scalar_lea.vmem [#allocation7], %s431
          %433 = dma.done %s429, 256
        $region60: #{tpu_custom_call.1} parent=55 // pred_fallthru
          _
      $region56: #{tpu_custom_call.1} parent=5 // pred_fallthru
        _
    $region6: #{tpu_custom_call.1} parent=1 // loop_footer
      %s22 = sadd.s32 1, %s18
    $region7: #{tpu_custom_call.1} parent=1 // loop_footer_branch
      %17 = sbr.rel target = $region3
    $region8: #{tpu_custom_call.1} parent=1 // loop_exit
      _
    %434 = vsyncpa [#allocation3], 1
    %s435 = scalar_lea.sflag [#allocation3], 1
    %436 = vsyncpa %s435, 1
    %437 = vsyncpa [#allocation6], 1
    %438 = vsyncpa [#allocation4], 1
    %s439 = scalar_lea.sflag [#allocation4], 1
    %440 = vsyncpa %s439, 1

</llo_original>
